<compile_context>
chip_gen: v7x
topology: tpu7x:2x2x1
jax: 0.10.0
libtpu: 0.0.40
codegen_flags: <defaults>
</compile_context>

<pallas_src>
import functools
import math

import jax
import jax.numpy as jnp
from jax.experimental import pallas as pl
from jax.experimental.pallas import tpu as pltpu

BCE_WEIGHT = 0.3
DICE_WEIGHT = 0.5
FOCAL_WEIGHT = 0.2
REG_WEIGHT = 0.001          # only used if model params are supplied
DICE_SMOOTH = 1.0
FOCAL_ALPHA = 0.8
FOCAL_GAMMA = 2.0           # gamma == 2 -> exact square, no transcendental pow
FOCAL_EPS = 1e-6            # reference-only; kernel reuses exact log-sigmoid

LANE = 128
TARGET_BLOCK_ELEMS = 512 * 1024   # ~2 MiB f32 per input block per buffer


def _full_sum(v):
    """Reduce a (B, R, LANE) array over its last two axes -> (B, 1, 1). Finalize only."""
    return jnp.sum(jnp.sum(v, axis=2, keepdims=True), axis=1, keepdims=True)


def _combined_loss_kernel(logits_ref, targets_ref, out_ref,
                          bce_acc, focal_acc, inter_acc, psum_acc, tsum_acc,
                          *, inv_total, acc_groups, bce_corr, focal_corr, psum_corr):
    step = pl.program_id(0)

    @pl.when(step == 0)
    def _init():
        bce_acc[...] = jnp.zeros_like(bce_acc)
        focal_acc[...] = jnp.zeros_like(focal_acc)
        inter_acc[...] = jnp.zeros_like(inter_acc)
        psum_acc[...] = jnp.zeros_like(psum_acc)
        tsum_acc[...] = jnp.zeros_like(tsum_acc)

    x = logits_ref[...].astype(jnp.float32)      # (B, TR, LANE)
    t = targets_ref[...].astype(jnp.float32)     # (B, TR, LANE)

    relu_x = jnp.maximum(x, 0.0)
    sp = jnp.log1p(jnp.exp(-jnp.abs(x)))         # softplus(-|x|): 3 EUP ops / element total
    bce_elem = relu_x - x * t + sp               # BCE-with-logits element (stable form)
    p = jnp.exp(x - relu_x - sp)                 # sigmoid(x)  (log_p = x - relu(x) - sp)
    tp = p * t                                   # reused: dice intersection & pt
    one_m_pt = t + p - 2.0 * tp                  # 1 - pt
    focal_elem = one_m_pt * one_m_pt * bce_elem  # gamma = 2; alpha applied at finalize

    def fold(v):
        # Fold the tile into the accumulator shape using vreg-wise VPU adds only.
        if acc_groups:                           # TR % 8 == 0 (standard path)
            return jnp.sum(v.reshape(v.shape[0], acc_groups, 8, LANE), axis=1)
        return jnp.sum(v, axis=1, keepdims=True)  # tiny single-block fallback

    bce_acc[...] += fold(bce_elem)
    focal_acc[...] += fold(focal_elem)
    inter_acc[...] += fold(tp)
    psum_acc[...] += fold(p)
    tsum_acc[...] += fold(t)

    @pl.when(step == pl.num_programs(0) - 1)
    def _finalize():
        b = bce_acc.shape[0]
        # Analytic removal of zero-padding contributions (compile-time constants).
        bce_sum = jnp.sum(_full_sum(bce_acc[...])) - jnp.float32(bce_corr)
        focal_sum = jnp.sum(_full_sum(focal_acc[...])) - jnp.float32(focal_corr)
        inter_b = _full_sum(inter_acc[...])                               # (B,1,1)
        psum_b = _full_sum(psum_acc[...]) - jnp.float32(psum_corr)
        tsum_b = _full_sum(tsum_acc[...])

        dice = (2.0 * inter_b + jnp.float32(DICE_SMOOTH)) / (
            psum_b + tsum_b + jnp.float32(DICE_SMOOTH))
        dice_loss = jnp.float32(1.0) - jnp.sum(dice) * jnp.float32(1.0 / b)
        bce_loss = bce_sum * jnp.float32(inv_total)
        focal_loss = focal_sum * jnp.float32(inv_total * FOCAL_ALPHA)
        out_ref[0, 0] = (jnp.float32(BCE_WEIGHT) * bce_loss
                         + jnp.float32(DICE_WEIGHT) * dice_loss
                         + jnp.float32(FOCAL_WEIGHT) * focal_loss)


def _pick_tiling(r, b, sub, tile_rows):
    """Choose (tile_rows, grid_steps) for the (b, r, 128) row axis."""
    cap = tile_rows if tile_rows is not None else TARGET_BLOCK_ELEMS // (b * LANE)
    cap = max(sub, cap)
    if r <= cap:
        return r, 1                              # single full-dim block: no padding needed
    desired = max(sub, (min(cap, r) // sub) * sub)
    # Prefer a multiple-of-`sub` divisor of r: no row padding -> no wrapper copy
    # (when n % 128 == 0) and no ragged last block.
    cand = desired
    min_accept = max(sub, desired // 4)
    while cand >= min_accept:
        if r % cand == 0:
            return cand, r // cand
        cand -= sub
    return desired, -(-r // desired)             # ragged: wrapper zero-pads the tail


def enhanced_combined_loss(logits, targets, model_params=None, tile_rows=None):
    """logits: (B, C, H, W); targets: (B, H, W) or (B, C, H, W). Returns scalar f32."""
    if targets.ndim == 3:
        targets = targets[:, None, :, :]         # unsqueeze(1)
    b = logits.shape[0]
    n = math.prod(logits.shape[1:])
    assert math.prod(targets.shape[1:]) == n, "logits/targets element count mismatch"
    assert n < 2**31, "flattened per-row length must fit int32"

    logits2d = logits.reshape(b, n)              # contiguous reshape (no copy)
    targets2d = targets.reshape(b, n)

    # Sublane multiple per dtype: f32 -> 8, bf16 -> 16, int8/bool -> 32.
    sub = max(8,
              32 // jnp.dtype(logits.dtype).itemsize,
              32 // jnp.dtype(targets.dtype).itemsize)
    r = -(-n // LANE)                            # 128-lane rows per batch row
    tr, steps = _pick_tiling(r, b, sub, tile_rows)
    rp = tr * steps
    pad = rp * LANE - n

    if pad:
        # Only taken for ragged shapes (n % 128 != 0 or no good divisor of r).
        # TODO(synk): a bulk+tail two-call split would avoid this whole-array copy.
        logits2d = jnp.pad(logits2d, ((0, 0), (0, pad)))
        targets2d = jnp.pad(targets2d, ((0, 0), (0, pad)))
    logits3d = logits2d.reshape(b, rp, LANE)
    targets3d = targets2d.reshape(b, rp, LANE)

    acc_groups = tr // 8 if tr % 8 == 0 else 0
    acc_rows = 8 if acc_groups else 1
    ln2 = math.log(2.0)
    kernel = functools.partial(
        _combined_loss_kernel,
        inv_total=1.0 / (b * n),
        acc_groups=acc_groups,
        bce_corr=b * pad * ln2,                  # padded (0,0) elems: bce = ln2
        focal_corr=0.25 * b * pad * ln2,         # focal (pre-alpha) = ln2 / 4
        psum_corr=0.5 * pad,                     # sigmoid(0) = 0.5 per padded elem/row
    )

    out = pl.pallas_call(
        kernel,
        out_shape=jax.ShapeDtypeStruct((1, 1), jnp.float32),
        grid=(steps,),
        in_specs=[
            pl.BlockSpec((b, tr, LANE), lambda i: (0, i, 0)),
            pl.BlockSpec((b, tr, LANE), lambda i: (0, i, 0)),
        ],
        out_specs=pl.BlockSpec((1, 1), lambda i: (0, 0), memory_space=pltpu.SMEM),
        scratch_shapes=[pltpu.VMEM((b, acc_rows, LANE), jnp.float32)
                        for _ in range(5)],
        compiler_params=pltpu.CompilerParams(
            dimension_semantics=("arbitrary",),
            vmem_limit_bytes=32 * 1024 * 1024),
    )(logits3d, targets3d)

    loss = out[0, 0]
    if model_params is not None and REG_WEIGHT > 0:
        # Reference reg term: sum of L2 norms of all parameters (plain JAX, tiny).
        reg = sum(jnp.sqrt(jnp.sum(jnp.square(p.astype(jnp.float32))))
                  for p in jax.tree_util.tree_leaves(model_params))
        loss = loss + jnp.float32(REG_WEIGHT) * reg
    return loss


def _reference_loss(logits, targets):
    """Plain-JAX reference mirroring the PyTorch module (incl. focal eps)."""
    if targets.ndim == 3:
        targets = targets[:, None, :, :]
    t = targets.astype(jnp.float32)
    x = logits.astype(jnp.float32)
    p = jax.nn.sigmoid(x)
    bce = jnp.mean(jnp.maximum(x, 0.0) - x * t + jnp.log1p(jnp.exp(-jnp.abs(x))))
    b = x.shape[0]
    pf, tf = p.reshape(b, -1), t.reshape(b, -1)
    inter = jnp.sum(pf * tf, axis=1)
    union = jnp.sum(pf, axis=1) + jnp.sum(tf, axis=1)
    dice = 1.0 - jnp.mean((2.0 * inter + DICE_SMOOTH) / (union + DICE_SMOOTH))
    pt = t * p + (1 - t) * (1 - p)
    fbce = -t * jnp.log(p + FOCAL_EPS) - (1 - t) * jnp.log(1 - p + FOCAL_EPS)
    focal = jnp.mean(FOCAL_ALPHA * (1 - pt) ** FOCAL_GAMMA * fbce)
    return BCE_WEIGHT * bce + DICE_WEIGHT * dice + FOCAL_WEIGHT * focal


if __name__ == "__main__":
    key = jax.random.PRNGKey(0)
    k = jax.random.split(key, 6)

    # Case 1: small shape -> single block (grid=1), no padding, no wrapper copy.
    B, C, H, W = 2, 1, 16, 16
    logits = jax.random.normal(k[0], (B, C, H, W), dtype=jnp.float32)
    targets = jax.random.bernoulli(k[1], 0.5, (B, H, W)).astype(jnp.float32)
    loss = enhanced_combined_loss(logits, targets)
    jax.block_until_ready(loss)
    ref = _reference_loss(logits, targets)
    assert jnp.allclose(loss, ref, rtol=1e-5, atol=1e-5), (loss, ref)

    # Case 2: forced small tile -> 4-step grid, exercises cross-step accumulation
    # with the wide (B,8,128) accumulators; still no padding (32 % 8 == 0).
    B2, C2, H2, W2 = 2, 1, 64, 64
    logits2 = jax.random.normal(k[2], (B2, C2, H2, W2), dtype=jnp.float32)
    targets2 = jax.random.bernoulli(k[3], 0.5, (B2, H2, W2)).astype(jnp.float32)
    loss2 = enhanced_combined_loss(logits2, targets2, tile_rows=8)
    jax.block_until_ready(loss2)
    ref2 = _reference_loss(logits2, targets2)
    assert jnp.allclose(loss2, ref2, rtol=1e-5, atol=1e-5), (loss2, ref2)

    # Case 3: ragged shape (1600 elems/row) -> lane+row zero padding; exercises
    # the analytic pad-constant subtraction in the finalize (no in-loop masking).
    B3, C3, H3, W3 = 2, 1, 40, 40
    logits3 = jax.random.normal(k[4], (B3, C3, H3, W3), dtype=jnp.float32)
    targets3 = jax.random.bernoulli(k[5], 0.5, (B3, H3, W3)).astype(jnp.float32)
    loss3 = enhanced_combined_loss(logits3, targets3, tile_rows=8)
    jax.block_until_ready(loss3)
    ref3 = _reference_loss(logits3, targets3)
    assert jnp.allclose(loss3, ref3, rtol=1e-5, atol=1e-5), (loss3, ref3)

    print("KERNEL_OK")
</pallas_src>

<mosaic_0001>
module attributes {stable_mosaic.version = 11 : i64} {
  func.func @_combined_loss_kernel(%arg0: i32, %arg1: memref<2x2x128xf32, #tpu.memory_space<vmem>>, %arg2: memref<2x2x128xf32, #tpu.memory_space<vmem>>, %arg3: memref<1x1xf32, #tpu.memory_space<smem>>, %arg4: memref<2x1x128xf32, #tpu.memory_space<vmem>>, %arg5: memref<2x1x128xf32, #tpu.memory_space<vmem>>, %arg6: memref<2x1x128xf32, #tpu.memory_space<vmem>>, %arg7: memref<2x1x128xf32, #tpu.memory_space<vmem>>, %arg8: memref<2x1x128xf32, #tpu.memory_space<vmem>>) attributes {dimension_semantics = [#tpu.dimension_semantics<arbitrary>], iteration_bounds = array<i64: 1>, scalar_prefetch = 0 : i64, scratch_operands = 5 : i64, tpu.core_type = #tpu.core_type<tc>, window_params = [{transform_indices = @transform_0, window_bounds = array<i64: 2, 2, 128>}, {transform_indices = @transform_1, window_bounds = array<i64: 2, 2, 128>}, {transform_indices = @transform_2, window_bounds = array<i64: 1, 1>}]} {
    %c0_i32 = arith.constant 0 : i32
    %0 = arith.cmpi eq, %arg0, %c0_i32 : i32
    %1 = arith.extui %0 : i1 to i32
    %c0_i32_0 = arith.constant 0 : i32
    %2 = arith.cmpi ne, %1, %c0_i32_0 : i32
    scf.if %2 {
      %cst_45 = arith.constant 0.000000e+00 : f32
      %53 = vector.broadcast %cst_45 : f32 to vector<2x1x128xf32>
      %c0_46 = arith.constant 0 : index
      %c0_47 = arith.constant 0 : index
      %c0_48 = arith.constant 0 : index
      %54 = vector.load %arg4[%c0_46, %c0_47, %c0_48] : memref<2x1x128xf32, #tpu.memory_space<vmem>>, vector<2x1x128xf32>
      tpu.vector_store %arg4[%c0_46, %c0_47, %c0_48], %53 {strides = array<i32>} : memref<2x1x128xf32, #tpu.memory_space<vmem>>, vector<2x1x128xf32>,
      %cst_49 = arith.constant 0.000000e+00 : f32
      %55 = vector.broadcast %cst_49 : f32 to vector<2x1x128xf32>
      %c0_50 = arith.constant 0 : index
      %c0_51 = arith.constant 0 : index
      %c0_52 = arith.constant 0 : index
      %56 = vector.load %arg5[%c0_50, %c0_51, %c0_52] : memref<2x1x128xf32, #tpu.memory_space<vmem>>, vector<2x1x128xf32>
      tpu.vector_store %arg5[%c0_50, %c0_51, %c0_52], %55 {strides = array<i32>} : memref<2x1x128xf32, #tpu.memory_space<vmem>>, vector<2x1x128xf32>,
      %cst_53 = arith.constant 0.000000e+00 : f32
      %57 = vector.broadcast %cst_53 : f32 to vector<2x1x128xf32>
      %c0_54 = arith.constant 0 : index
      %c0_55 = arith.constant 0 : index
      %c0_56 = arith.constant 0 : index
      %58 = vector.load %arg6[%c0_54, %c0_55, %c0_56] : memref<2x1x128xf32, #tpu.memory_space<vmem>>, vector<2x1x128xf32>
      tpu.vector_store %arg6[%c0_54, %c0_55, %c0_56], %57 {strides = array<i32>} : memref<2x1x128xf32, #tpu.memory_space<vmem>>, vector<2x1x128xf32>,
      %cst_57 = arith.constant 0.000000e+00 : f32
      %59 = vector.broadcast %cst_57 : f32 to vector<2x1x128xf32>
      %c0_58 = arith.constant 0 : index
      %c0_59 = arith.constant 0 : index
      %c0_60 = arith.constant 0 : index
      %60 = vector.load %arg7[%c0_58, %c0_59, %c0_60] : memref<2x1x128xf32, #tpu.memory_space<vmem>>, vector<2x1x128xf32>
      tpu.vector_store %arg7[%c0_58, %c0_59, %c0_60], %59 {strides = array<i32>} : memref<2x1x128xf32, #tpu.memory_space<vmem>>, vector<2x1x128xf32>,
      %cst_61 = arith.constant 0.000000e+00 : f32
      %61 = vector.broadcast %cst_61 : f32 to vector<2x1x128xf32>
      %c0_62 = arith.constant 0 : index
      %c0_63 = arith.constant 0 : index
      %c0_64 = arith.constant 0 : index
      %62 = vector.load %arg8[%c0_62, %c0_63, %c0_64] : memref<2x1x128xf32, #tpu.memory_space<vmem>>, vector<2x1x128xf32>
      tpu.vector_store %arg8[%c0_62, %c0_63, %c0_64], %61 {strides = array<i32>} : memref<2x1x128xf32, #tpu.memory_space<vmem>>, vector<2x1x128xf32>,
    } else {
    }
    %c0 = arith.constant 0 : index
    %c0_1 = arith.constant 0 : index
    %c0_2 = arith.constant 0 : index
    %3 = vector.load %arg1[%c0, %c0_1, %c0_2] : memref<2x2x128xf32, #tpu.memory_space<vmem>>, vector<2x2x128xf32>
    %c0_3 = arith.constant 0 : index
    %c0_4 = arith.constant 0 : index
    %c0_5 = arith.constant 0 : index
    %4 = vector.load %arg2[%c0_3, %c0_4, %c0_5] : memref<2x2x128xf32, #tpu.memory_space<vmem>>, vector<2x2x128xf32>
    %cst = arith.constant 0.000000e+00 : f32
    %5 = vector.broadcast %cst : f32 to vector<2x2x128xf32>
    %6 = arith.maximumf %3, %5 : vector<2x2x128xf32>
    %7 = math.absf %3 : vector<2x2x128xf32>
    %cst_6 = arith.constant 0.000000e+00 : f32
    %8 = vector.broadcast %cst_6 : f32 to vector<2x2x128xf32>
    %9 = arith.subf %8, %7 : vector<2x2x128xf32>
    %10 = math.exp %9 : vector<2x2x128xf32>
    %11 = math.log1p %10 : vector<2x2x128xf32>
    %12 = arith.mulf %3, %4 : vector<2x2x128xf32>
    %13 = arith.subf %6, %12 : vector<2x2x128xf32>
    %14 = arith.addf %13, %11 : vector<2x2x128xf32>
    %15 = arith.subf %3, %6 : vector<2x2x128xf32>
    %16 = arith.subf %15, %11 : vector<2x2x128xf32>
    %17 = math.exp %16 : vector<2x2x128xf32>
    %18 = arith.mulf %17, %4 : vector<2x2x128xf32>
    %19 = arith.addf %4, %17 : vector<2x2x128xf32>
    %cst_7 = arith.constant 2.000000e+00 : f32
    %20 = vector.broadcast %cst_7 : f32 to vector<2x2x128xf32>
    %21 = arith.mulf %20, %18 : vector<2x2x128xf32>
    %22 = arith.subf %19, %21 : vector<2x2x128xf32>
    %23 = arith.mulf %22, %22 : vector<2x2x128xf32>
    %24 = arith.mulf %23, %14 : vector<2x2x128xf32>
    %c0_8 = arith.constant 0 : index
    %c0_9 = arith.constant 0 : index
    %c0_10 = arith.constant 0 : index
    %25 = vector.load %arg4[%c0_8, %c0_9, %c0_10] : memref<2x1x128xf32, #tpu.memory_space<vmem>>, vector<2x1x128xf32>
    %cst_11 = arith.constant dense<0.000000e+00> : vector<2x128xf32>
    %26 = vector.multi_reduction <add>, %14, %cst_11 [1] : vector<2x2x128xf32> to vector<2x128xf32>
    %27 = vector.shape_cast %26 : vector<2x128xf32> to vector<2x1x128xf32>
    %28 = arith.addf %25, %27 : vector<2x1x128xf32>
    %c0_12 = arith.constant 0 : index
    %c0_13 = arith.constant 0 : index
    %c0_14 = arith.constant 0 : index
    %29 = vector.load %arg4[%c0_12, %c0_13, %c0_14] : memref<2x1x128xf32, #tpu.memory_space<vmem>>, vector<2x1x128xf32>
    tpu.vector_store %arg4[%c0_12, %c0_13, %c0_14], %28 {strides = array<i32>} : memref<2x1x128xf32, #tpu.memory_space<vmem>>, vector<2x1x128xf32>,
    %c0_15 = arith.constant 0 : index
    %c0_16 = arith.constant 0 : index
    %c0_17 = arith.constant 0 : index
    %30 = vector.load %arg5[%c0_15, %c0_16, %c0_17] : memref<2x1x128xf32, #tpu.memory_space<vmem>>, vector<2x1x128xf32>
    %cst_18 = arith.constant dense<0.000000e+00> : vector<2x128xf32>
    %31 = vector.multi_reduction <add>, %24, %cst_18 [1] : vector<2x2x128xf32> to vector<2x128xf32>
    %32 = vector.shape_cast %31 : vector<2x128xf32> to vector<2x1x128xf32>
    %33 = arith.addf %30, %32 : vector<2x1x128xf32>
    %c0_19 = arith.constant 0 : index
    %c0_20 = arith.constant 0 : index
    %c0_21 = arith.constant 0 : index
    %34 = vector.load %arg5[%c0_19, %c0_20, %c0_21] : memref<2x1x128xf32, #tpu.memory_space<vmem>>, vector<2x1x128xf32>
    tpu.vector_store %arg5[%c0_19, %c0_20, %c0_21], %33 {strides = array<i32>} : memref<2x1x128xf32, #tpu.memory_space<vmem>>, vector<2x1x128xf32>,
    %c0_22 = arith.constant 0 : index
    %c0_23 = arith.constant 0 : index
    %c0_24 = arith.constant 0 : index
    %35 = vector.load %arg6[%c0_22, %c0_23, %c0_24] : memref<2x1x128xf32, #tpu.memory_space<vmem>>, vector<2x1x128xf32>
    %cst_25 = arith.constant dense<0.000000e+00> : vector<2x128xf32>
    %36 = vector.multi_reduction <add>, %18, %cst_25 [1] : vector<2x2x128xf32> to vector<2x128xf32>
    %37 = vector.shape_cast %36 : vector<2x128xf32> to vector<2x1x128xf32>
    %38 = arith.addf %35, %37 : vector<2x1x128xf32>
    %c0_26 = arith.constant 0 : index
    %c0_27 = arith.constant 0 : index
    %c0_28 = arith.constant 0 : index
    %39 = vector.load %arg6[%c0_26, %c0_27, %c0_28] : memref<2x1x128xf32, #tpu.memory_space<vmem>>, vector<2x1x128xf32>
    tpu.vector_store %arg6[%c0_26, %c0_27, %c0_28], %38 {strides = array<i32>} : memref<2x1x128xf32, #tpu.memory_space<vmem>>, vector<2x1x128xf32>,
    %c0_29 = arith.constant 0 : index
    %c0_30 = arith.constant 0 : index
    %c0_31 = arith.constant 0 : index
    %40 = vector.load %arg7[%c0_29, %c0_30, %c0_31] : memref<2x1x128xf32, #tpu.memory_space<vmem>>, vector<2x1x128xf32>
    %cst_32 = arith.constant dense<0.000000e+00> : vector<2x128xf32>
    %41 = vector.multi_reduction <add>, %17, %cst_32 [1] : vector<2x2x128xf32> to vector<2x128xf32>
    %42 = vector.shape_cast %41 : vector<2x128xf32> to vector<2x1x128xf32>
    %43 = arith.addf %40, %42 : vector<2x1x128xf32>
    %c0_33 = arith.constant 0 : index
    %c0_34 = arith.constant 0 : index
    %c0_35 = arith.constant 0 : index
    %44 = vector.load %arg7[%c0_33, %c0_34, %c0_35] : memref<2x1x128xf32, #tpu.memory_space<vmem>>, vector<2x1x128xf32>
    tpu.vector_store %arg7[%c0_33, %c0_34, %c0_35], %43 {strides = array<i32>} : memref<2x1x128xf32, #tpu.memory_space<vmem>>, vector<2x1x128xf32>,
    %c0_36 = arith.constant 0 : index
    %c0_37 = arith.constant 0 : index
    %c0_38 = arith.constant 0 : index
    %45 = vector.load %arg8[%c0_36, %c0_37, %c0_38] : memref<2x1x128xf32, #tpu.memory_space<vmem>>, vector<2x1x128xf32>
    %cst_39 = arith.constant dense<0.000000e+00> : vector<2x128xf32>
    %46 = vector.multi_reduction <add>, %4, %cst_39 [1] : vector<2x2x128xf32> to vector<2x128xf32>
    %47 = vector.shape_cast %46 : vector<2x128xf32> to vector<2x1x128xf32>
    %48 = arith.addf %45, %47 : vector<2x1x128xf32>
    %c0_40 = arith.constant 0 : index
    %c0_41 = arith.constant 0 : index
    %c0_42 = arith.constant 0 : index
    %49 = vector.load %arg8[%c0_40, %c0_41, %c0_42] : memref<2x1x128xf32, #tpu.memory_space<vmem>>, vector<2x1x128xf32>
    tpu.vector_store %arg8[%c0_40, %c0_41, %c0_42], %48 {strides = array<i32>} : memref<2x1x128xf32, #tpu.memory_space<vmem>>, vector<2x1x128xf32>,
    %c0_i32_43 = arith.constant 0 : i32
    %50 = arith.cmpi eq, %arg0, %c0_i32_43 : i32
    %51 = arith.extui %50 : i1 to i32
    %c0_i32_44 = arith.constant 0 : i32
    %52 = arith.cmpi ne, %51, %c0_i32_44 : i32
    scf.if %52 {
      %c0_45 = arith.constant 0 : index
      %c0_46 = arith.constant 0 : index
      %c0_47 = arith.constant 0 : index
      %53 = vector.load %arg4[%c0_45, %c0_46, %c0_47] : memref<2x1x128xf32, #tpu.memory_space<vmem>>, vector<2x1x128xf32>
      %cst_48 = arith.constant dense<0.000000e+00> : vector<2x1xf32>
      %54 = vector.multi_reduction <add>, %53, %cst_48 [2] : vector<2x1x128xf32> to vector<2x1xf32>
      %55 = vector.shape_cast %54 : vector<2x1xf32> to vector<2x1x1xf32>
      %cst_49 = arith.constant dense<0.000000e+00> : vector<2x1xf32>
      %56 = vector.multi_reduction <add>, %55, %cst_49 [1] : vector<2x1x1xf32> to vector<2x1xf32>
      %57 = vector.shape_cast %56 : vector<2x1xf32> to vector<2x1x1xf32>
      %58 = vector.shape_cast %57 : vector<2x1x1xf32> to vector<1x2x1x1xf32>
      %cst_50 = arith.constant dense<0.000000e+00> : vector<1xf32>
      %59 = vector.multi_reduction <add>, %58, %cst_50 [1, 2, 3] : vector<1x2x1x1xf32> to vector<1xf32>
      %60 = vector.shape_cast %59 : vector<1xf32> to vector<1x1x1x1xf32>
      %61 = vector.extract %60[0, 0, 0, 0] : f32 from vector<1x1x1x1xf32>
      %cst_51 = arith.constant 0.000000e+00 : f32
      %62 = arith.subf %61, %cst_51 : f32
      %c0_52 = arith.constant 0 : index
      %c0_53 = arith.constant 0 : index
      %c0_54 = arith.constant 0 : index
      %63 = vector.load %arg5[%c0_52, %c0_53, %c0_54] : memref<2x1x128xf32, #tpu.memory_space<vmem>>, vector<2x1x128xf32>
      %cst_55 = arith.constant dense<0.000000e+00> : vector<2x1xf32>
      %64 = vector.multi_reduction <add>, %63, %cst_55 [2] : vector<2x1x128xf32> to vector<2x1xf32>
      %65 = vector.shape_cast %64 : vector<2x1xf32> to vector<2x1x1xf32>
      %cst_56 = arith.constant dense<0.000000e+00> : vector<2x1xf32>
      %66 = vector.multi_reduction <add>, %65, %cst_56 [1] : vector<2x1x1xf32> to vector<2x1xf32>
      %67 = vector.shape_cast %66 : vector<2x1xf32> to vector<2x1x1xf32>
      %68 = vector.shape_cast %67 : vector<2x1x1xf32> to vector<1x2x1x1xf32>
      %cst_57 = arith.constant dense<0.000000e+00> : vector<1xf32>
      %69 = vector.multi_reduction <add>, %68, %cst_57 [1, 2, 3] : vector<1x2x1x1xf32> to vector<1xf32>
      %70 = vector.shape_cast %69 : vector<1xf32> to vector<1x1x1x1xf32>
      %71 = vector.extract %70[0, 0, 0, 0] : f32 from vector<1x1x1x1xf32>
      %cst_58 = arith.constant 0.000000e+00 : f32
      %72 = arith.subf %71, %cst_58 : f32
      %c0_59 = arith.constant 0 : index
      %c0_60 = arith.constant 0 : index
      %c0_61 = arith.constant 0 : index
      %73 = vector.load %arg6[%c0_59, %c0_60, %c0_61] : memref<2x1x128xf32, #tpu.memory_space<vmem>>, vector<2x1x128xf32>
      %cst_62 = arith.constant dense<0.000000e+00> : vector<2x1xf32>
      %74 = vector.multi_reduction <add>, %73, %cst_62 [2] : vector<2x1x128xf32> to vector<2x1xf32>
      %75 = vector.shape_cast %74 : vector<2x1xf32> to vector<2x1x1xf32>
      %cst_63 = arith.constant dense<0.000000e+00> : vector<2x1xf32>
      %76 = vector.multi_reduction <add>, %75, %cst_63 [1] : vector<2x1x1xf32> to vector<2x1xf32>
      %77 = vector.shape_cast %76 : vector<2x1xf32> to vector<2x1x1xf32>
      %c0_64 = arith.constant 0 : index
      %c0_65 = arith.constant 0 : index
      %c0_66 = arith.constant 0 : index
      %78 = vector.load %arg7[%c0_64, %c0_65, %c0_66] : memref<2x1x128xf32, #tpu.memory_space<vmem>>, vector<2x1x128xf32>
      %cst_67 = arith.constant dense<0.000000e+00> : vector<2x1xf32>
      %79 = vector.multi_reduction <add>, %78, %cst_67 [2] : vector<2x1x128xf32> to vector<2x1xf32>
      %80 = vector.shape_cast %79 : vector<2x1xf32> to vector<2x1x1xf32>
      %cst_68 = arith.constant dense<0.000000e+00> : vector<2x1xf32>
      %81 = vector.multi_reduction <add>, %80, %cst_68 [1] : vector<2x1x1xf32> to vector<2x1xf32>
      %82 = vector.shape_cast %81 : vector<2x1xf32> to vector<2x1x1xf32>
      %cst_69 = arith.constant 0.000000e+00 : f32
      %83 = vector.broadcast %cst_69 : f32 to vector<2x1x1xf32>
      %84 = arith.subf %82, %83 : vector<2x1x1xf32>
      %c0_70 = arith.constant 0 : index
      %c0_71 = arith.constant 0 : index
      %c0_72 = arith.constant 0 : index
      %85 = vector.load %arg8[%c0_70, %c0_71, %c0_72] : memref<2x1x128xf32, #tpu.memory_space<vmem>>, vector<2x1x128xf32>
      %cst_73 = arith.constant dense<0.000000e+00> : vector<2x1xf32>
      %86 = vector.multi_reduction <add>, %85, %cst_73 [2] : vector<2x1x128xf32> to vector<2x1xf32>
      %87 = vector.shape_cast %86 : vector<2x1xf32> to vector<2x1x1xf32>
      %cst_74 = arith.constant dense<0.000000e+00> : vector<2x1xf32>
      %88 = vector.multi_reduction <add>, %87, %cst_74 [1] : vector<2x1x1xf32> to vector<2x1xf32>
      %89 = vector.shape_cast %88 : vector<2x1xf32> to vector<2x1x1xf32>
      %cst_75 = arith.constant 2.000000e+00 : f32
      %90 = vector.broadcast %cst_75 : f32 to vector<2x1x1xf32>
      %91 = arith.mulf %90, %77 : vector<2x1x1xf32>
      %cst_76 = arith.constant 1.000000e+00 : f32
      %92 = vector.broadcast %cst_76 : f32 to vector<2x1x1xf32>
      %93 = arith.addf %91, %92 : vector<2x1x1xf32>
      %94 = arith.addf %84, %89 : vector<2x1x1xf32>
      %cst_77 = arith.constant 1.000000e+00 : f32
      %95 = vector.broadcast %cst_77 : f32 to vector<2x1x1xf32>
      %96 = arith.addf %94, %95 : vector<2x1x1xf32>
      %97 = arith.divf %93, %96 : vector<2x1x1xf32>
      %98 = vector.shape_cast %97 : vector<2x1x1xf32> to vector<1x2x1x1xf32>
      %cst_78 = arith.constant dense<0.000000e+00> : vector<1xf32>
      %99 = vector.multi_reduction <add>, %98, %cst_78 [1, 2, 3] : vector<1x2x1x1xf32> to vector<1xf32>
      %100 = vector.shape_cast %99 : vector<1xf32> to vector<1x1x1x1xf32>
      %101 = vector.extract %100[0, 0, 0, 0] : f32 from vector<1x1x1x1xf32>
      %cst_79 = arith.constant 5.000000e-01 : f32
      %102 = arith.mulf %101, %cst_79 : f32
      %cst_80 = arith.constant 1.000000e+00 : f32
      %103 = arith.subf %cst_80, %102 : f32
      %cst_81 = arith.constant 0.001953125 : f32
      %104 = arith.mulf %62, %cst_81 : f32
      %cst_82 = arith.constant 1.562500e-03 : f32
      %105 = arith.mulf %72, %cst_82 : f32
      %cst_83 = arith.constant 3.000000e-01 : f32
      %106 = arith.mulf %cst_83, %104 : f32
      %cst_84 = arith.constant 5.000000e-01 : f32
      %107 = arith.mulf %cst_84, %103 : f32
      %108 = arith.addf %106, %107 : f32
      %cst_85 = arith.constant 2.000000e-01 : f32
      %109 = arith.mulf %cst_85, %105 : f32
      %110 = arith.addf %108, %109 : f32
      %c0_86 = arith.constant 0 : index
      %c0_87 = arith.constant 0 : index
      %111 = memref.load %arg3[%c0_86, %c0_87] : memref<1x1xf32, #tpu.memory_space<smem>>
      memref.store %110, %arg3[%c0_86, %c0_87] : memref<1x1xf32, #tpu.memory_space<smem>>
    } else {
    }
    return
  }
  func.func @transform_0(%arg0: i32) -> (i32, i32, i32) {
    %c0_i32 = arith.constant 0 : i32
    %c0_i32_0 = arith.constant 0 : i32
    %c0_i32_1 = arith.constant 0 : i32
    return %c0_i32, %arg0, %c0_i32_0 : i32, i32, i32
  }
  func.func @transform_1(%arg0: i32) -> (i32, i32, i32) {
    %c0_i32 = arith.constant 0 : i32
    %c0_i32_0 = arith.constant 0 : i32
    %c0_i32_1 = arith.constant 0 : i32
    return %c0_i32, %arg0, %c0_i32_0 : i32, i32, i32
  }
  func.func @transform_2(%arg0: i32) -> (i32, i32) {
    %c0_i32 = arith.constant 0 : i32
    %c0_i32_0 = arith.constant 0 : i32
    %c0_i32_1 = arith.constant 0 : i32
    return %c0_i32, %c0_i32_0 : i32, i32
  }
}

</mosaic_0001>

<llo_original>
// kernel: tpu_custom_call.1
$region0: #{tpu_custom_call.1}
  #allocation0 [shape = 'u32[]', space=smem, size = 0x4, offset = 0x4, fixed_abs, tag = 'smem constant byte address 0x4 - core index']
  #allocation1 [shape = 'u32[144,128]{1,0:T(1,128)}', space=vmem, size = 0x12000, scoped, tag = 'internal scratch']
  #allocation2 [shape = 'f32[2,1,128]{2,1,0:T(1,128)}', space=vmem, size = 0x400, scoped, tag = 'scratch operand']
  #allocation3 [shape = 'f32[2,1,128]{2,1,0:T(1,128)}', space=vmem, size = 0x400, scoped, tag = 'scratch operand']
  #allocation4 [shape = 'f32[2,1,128]{2,1,0:T(1,128)}', space=vmem, size = 0x400, scoped, tag = 'scratch operand']
  #allocation5 [shape = 'f32[2,1,128]{2,1,0:T(1,128)}', space=vmem, size = 0x400, scoped, tag = 'scratch operand']
  #allocation6 [shape = 'f32[2,1,128]{2,1,0:T(1,128)}', space=vmem, size = 0x400, scoped, tag = 'scratch operand']
  %s0 = inlined_call_operand.hbm [shape: f32[2,2,128], index: 0, kind: input, shape index: {}]
  %s1 = inlined_call_operand.hbm [shape: f32[2,2,128], index: 1, kind: input, shape index: {}]
  %s2 = inlined_call_operand.hbm [shape: f32[1,1], index: 2, kind: output, shape index: {}]
  %s3 = sld [smem:[#allocation0]]
  $region34: #{tpu_custom_call.1} parent=0
    _
  %s5 = ssub.s32 1, %s3
  %s6 = scalar_select 0, %s5, %s3
  $region1: #{tpu_custom_call.1} parent=0
    #allocation7 [shape = 'u8[2048]{0}', space=vmem, size = 0x800, scoped, tag = 'input window, operand 0, single buffered']
    #allocation8 [shape = 's32[1]{0}', space=sflag, size = 0x4, scoped, tag = 'scoped memory for tpu_custom_call.1']
    #allocation9 [shape = 's32[1]{0}', space=sflag, size = 0x4, scoped, tag = 'scoped memory for tpu_custom_call.1']
    #allocation10 [shape = 'u8[2048]{0}', space=vmem, size = 0x800, scoped, tag = 'input window, operand 1, single buffered']
    #allocation11 [shape = 's32[1]{0}', space=sflag, size = 0x4, scoped, tag = 'scoped memory for tpu_custom_call.1']
    #allocation12 [shape = 'u8[512]{0}', space=smem, size = 0x200, scoped, tag = 'output window, operand 0, single buffered']
    %7 = vsyncpa [#allocation8], 0
    %8 = vsyncpa [#allocation11], 0
    %9 = vsyncpa [#allocation9], 0
    // Predicated region
    $region2: #{tpu_custom_call.1} parent=1 // pred_check
      _
    $region3: #{tpu_custom_call.1} parent=1 // pred_check_branch
      %11 = sbr.rel (0) target = $region5
    $region4: #{tpu_custom_call.1} parent=1 // pred_region
      %s13 = ssub.s32 64, 64
      %14 = vsyncadd [#allocation8], %s13
      %s15 = sshll.u32 [#allocation7], 4
      %s16 = int_to_ptr.vmem [resolvable:$true] %s15
      %21 = dma.hbm_to_vmem [thread:$0]  %s0, 64, %s16, [#allocation8], 32, 32, 2
    $region5: #{tpu_custom_call.1} parent=1 // pred_fallthru
      _
    // Predicated region
    $region6: #{tpu_custom_call.1} parent=1 // pred_check
      _
    $region7: #{tpu_custom_call.1} parent=1 // pred_check_branch
      %23 = sbr.rel (0) target = $region9
    $region8: #{tpu_custom_call.1} parent=1 // pred_region
      %s25 = ssub.s32 64, 64
      %26 = vsyncadd [#allocation11], %s25
      %s27 = sshll.u32 [#allocation10], 4
      %s28 = int_to_ptr.vmem [resolvable:$true] %s27
      %33 = dma.hbm_to_vmem [thread:$0]  %s1, 64, %s28, [#allocation11], 32, 32, 2
    $region9: #{tpu_custom_call.1} parent=1 // pred_fallthru
      _
    // Predicated region
    $region10: #{tpu_custom_call.1} parent=1 // pred_check
      _
    $region11: #{tpu_custom_call.1} parent=1 // pred_check_branch
      %35 = sbr.rel (0) target = $region13
    $region12: #{tpu_custom_call.1} parent=1 // pred_region
      %36 = dma.done [#allocation8], 64
    $region13: #{tpu_custom_call.1} parent=1 // pred_fallthru
      _
    // Predicated region
    $region14: #{tpu_custom_call.1} parent=1 // pred_check
      _
    $region15: #{tpu_custom_call.1} parent=1 // pred_check_branch
      %38 = sbr.rel (0) target = $region17
    $region16: #{tpu_custom_call.1} parent=1 // pred_region
      %39 = dma.done [#allocation11], 64
    $region17: #{tpu_custom_call.1} parent=1 // pred_fallthru
      _
    %p40 = scmp.eq.s32.totalorder 0, 0
    // Predicated region
    $region18: #{tpu_custom_call.1} parent=1 // pred_check
      %p41 = pneg %p40
    $region19: #{tpu_custom_call.1} parent=1 // pred_check_branch
      %43 = sbr.rel (%p41) target = $region21
    $region20: #{tpu_custom_call.1} parent=1 // pred_region
      %44 = vst [vmem:[#allocation2] sm:$0x1] 0.0
      %45 = vst [vmem:[#allocation2 + $0x1] sm:$0x1] 0.0
      %46 = vst [vmem:[#allocation3] sm:$0x1] 0.0
      %47 = vst [vmem:[#allocation3 + $0x1] sm:$0x1] 0.0
      %48 = vst [vmem:[#allocation4] sm:$0x1] 0.0
      %49 = vst [vmem:[#allocation4 + $0x1] sm:$0x1] 0.0
      %50 = vst [vmem:[#allocation5] sm:$0x1] 0.0
      %51 = vst [vmem:[#allocation5 + $0x1] sm:$0x1] 0.0
      %52 = vst [vmem:[#allocation6] sm:$0x1] 0.0
      %53 = vst [vmem:[#allocation6 + $0x1] sm:$0x1] 0.0
    $region21: #{tpu_custom_call.1} parent=1 // pred_fallthru
      _
    %v54 = vld [vmem:[#allocation7] sm:$0x3]
    %v55 = vld [vmem:[#allocation7 + $0x2] sm:$0x3]
    %v56 = vld [vmem:[#allocation10] sm:$0x3]
    %v57 = vld [vmem:[#allocation10 + $0x2] sm:$0x3]
    %v58 = vmax.f32 %v54, 0.0
    %v59 = vmax.f32 %v55, 0.0
    %v60 = vand.u32 2147483647, %v54
    %v61 = vand.u32 2147483647, %v55
    %v62 = vsub.f32 0.0, %v60
    %v63 = vsub.f32 0.0, %v61
    %v64 = vmul.f32 %v62, 1.442695
    %v65 = vpow.pop %v64
    %v66 = vmul.f32 %v63, 1.442695
    %v67 = vpow.pop %v66
    %v68 = vadd.f32 %v65, 1.0
    %v69 = vlog2.pop %v68
    %v70 = vmul.f32 %v69, 0.6931472
    %v71 = vmul.f32 -0.5, %v65
    %v72 = vadd.f32 %v71, 1.0
    %v73 = vmul.f32 %v72, %v65
    %v74 = vand.u32 2147483647, %v65
    %vm75 = vcmp.lt.f32.partialorder %v74, 0.0004427343
    %v76 = vsel %vm75, %v73, %v70
    %v77 = vadd.f32 %v67, 1.0
    %v78 = vlog2.pop %v77
    %v79 = vmul.f32 %v78, 0.6931472
    %v80 = vmul.f32 -0.5, %v67
    %v81 = vadd.f32 %v80, 1.0
    %v82 = vmul.f32 %v81, %v67
    %v83 = vand.u32 2147483647, %v67
    %vm84 = vcmp.lt.f32.partialorder %v83, 0.0004427343
    %v85 = vsel %vm84, %v82, %v79
    %v86 = vmul.f32 %v54, %v56
    %v87 = vmul.f32 %v55, %v57
    %v88 = vsub.f32 %v58, %v86
    %v89 = vsub.f32 %v59, %v87
    %v90 = vadd.f32 %v88, %v76
    %v91 = vadd.f32 %v89, %v85
    %v92 = vsub.f32 %v54, %v58
    %v93 = vsub.f32 %v55, %v59
    %v94 = vsub.f32 %v92, %v76
    %v95 = vsub.f32 %v93, %v85
    %v96 = vmul.f32 %v94, 1.442695
    %v97 = vpow.pop %v96
    %v98 = vmul.f32 %v95, 1.442695
    %v99 = vpow.pop %v98
    %v100 = vmul.f32 %v97, %v56
    %v101 = vmul.f32 %v99, %v57
    %v102 = vadd.f32 %v56, %v97
    %v103 = vadd.f32 %v57, %v99
    %v104 = vmul.f32 %v100, 2.0
    %v105 = vmul.f32 %v101, 2.0
    %v106 = vsub.f32 %v102, %v104
    %v107 = vsub.f32 %v103, %v105
    %v108 = vmul.f32 %v106, %v106
    %v109 = vmul.f32 %v107, %v107
    %v110 = vmul.f32 %v108, %v90
    %v111 = vmul.f32 %v109, %v91
    %v112 = vld [vmem:[#allocation2] sm:$0x1]
    %v113 = vld [vmem:[#allocation2 + $0x1] sm:$0x1]
    %vm114 = vcmask 1041408
    %v115 = vsel %vm114, %v90, 0.0
    %v116 = vrot.slane %v115, 4
    %v117 = vadd.f32 %v115, %v116
    %v118 = vrot.slane %v117, 2
    %v119 = vadd.f32 %v117, %v118
    %v120 = vrot.slane %v119, 1
    %v121 = vadd.f32 %v119, %v120
    %v122 = vsel %vm114, %v91, 0.0
    %v123 = vrot.slane %v122, 4
    %v124 = vadd.f32 %v122, %v123
    %v125 = vrot.slane %v124, 2
    %v126 = vadd.f32 %v124, %v125
    %v127 = vrot.slane %v126, 1
    %v128 = vadd.f32 %v126, %v127
    %v129 = vadd.f32 %v112, %v121
    %v130 = vadd.f32 %v113, %v128
    %131 = vst [vmem:[#allocation2] sm:$0x1] %v129
    %132 = vst [vmem:[#allocation2 + $0x1] sm:$0x1] %v130
    %v133 = vld [vmem:[#allocation3] sm:$0x1]
    %v134 = vld [vmem:[#allocation3 + $0x1] sm:$0x1]
    %v135 = vsel %vm114, %v110, 0.0
    %v136 = vrot.slane %v135, 4
    %v137 = vadd.f32 %v135, %v136
    %v138 = vrot.slane %v137, 2
    %v139 = vadd.f32 %v137, %v138
    %v140 = vrot.slane %v139, 1
    %v141 = vadd.f32 %v139, %v140
    %v142 = vsel %vm114, %v111, 0.0
    %v143 = vrot.slane %v142, 4
    %v144 = vadd.f32 %v142, %v143
    %v145 = vrot.slane %v144, 2
    %v146 = vadd.f32 %v144, %v145
    %v147 = vrot.slane %v146, 1
    %v148 = vadd.f32 %v146, %v147
    %v149 = vadd.f32 %v133, %v141
    %v150 = vadd.f32 %v134, %v148
    %151 = vst [vmem:[#allocation3] sm:$0x1] %v149
    %152 = vst [vmem:[#allocation3 + $0x1] sm:$0x1] %v150
    %v153 = vld [vmem:[#allocation4] sm:$0x1]
    %v154 = vld [vmem:[#allocation4 + $0x1] sm:$0x1]
    %v155 = vsel %vm114, %v100, 0.0
    %v156 = vrot.slane %v155, 4
    %v157 = vadd.f32 %v155, %v156
    %v158 = vrot.slane %v157, 2
    %v159 = vadd.f32 %v157, %v158
    %v160 = vrot.slane %v159, 1
    %v161 = vadd.f32 %v159, %v160
    %v162 = vsel %vm114, %v101, 0.0
    %v163 = vrot.slane %v162, 4
    %v164 = vadd.f32 %v162, %v163
    %v165 = vrot.slane %v164, 2
    %v166 = vadd.f32 %v164, %v165
    %v167 = vrot.slane %v166, 1
    %v168 = vadd.f32 %v166, %v167
    %v169 = vadd.f32 %v153, %v161
    %v170 = vadd.f32 %v154, %v168
    %171 = vst [vmem:[#allocation4] sm:$0x1] %v169
    %172 = vst [vmem:[#allocation4 + $0x1] sm:$0x1] %v170
    %v173 = vld [vmem:[#allocation5] sm:$0x1]
    %v174 = vld [vmem:[#allocation5 + $0x1] sm:$0x1]
    %v175 = vsel %vm114, %v97, 0.0
    %v176 = vrot.slane %v175, 4
    %v177 = vadd.f32 %v175, %v176
    %v178 = vrot.slane %v177, 2
    %v179 = vadd.f32 %v177, %v178
    %v180 = vrot.slane %v179, 1
    %v181 = vadd.f32 %v179, %v180
    %v182 = vsel %vm114, %v99, 0.0
    %v183 = vrot.slane %v182, 4
    %v184 = vadd.f32 %v182, %v183
    %v185 = vrot.slane %v184, 2
    %v186 = vadd.f32 %v184, %v185
    %v187 = vrot.slane %v186, 1
    %v188 = vadd.f32 %v186, %v187
    %v189 = vadd.f32 %v173, %v181
    %v190 = vadd.f32 %v174, %v188
    %191 = vst [vmem:[#allocation5] sm:$0x1] %v189
    %192 = vst [vmem:[#allocation5 + $0x1] sm:$0x1] %v190
    %v193 = vld [vmem:[#allocation6] sm:$0x1]
    %v194 = vld [vmem:[#allocation6 + $0x1] sm:$0x1]
    %v195 = vsel %vm114, %v56, 0.0
    %v196 = vrot.slane %v195, 4
    %v197 = vadd.f32 %v195, %v196
    %v198 = vrot.slane %v197, 2
    %v199 = vadd.f32 %v197, %v198
    %v200 = vrot.slane %v199, 1
    %v201 = vadd.f32 %v199, %v200
    %v202 = vsel %vm114, %v57, 0.0
    %v203 = vrot.slane %v202, 4
    %v204 = vadd.f32 %v202, %v203
    %v205 = vrot.slane %v204, 2
    %v206 = vadd.f32 %v204, %v205
    %v207 = vrot.slane %v206, 1
    %v208 = vadd.f32 %v206, %v207
    %v209 = vadd.f32 %v193, %v201
    %v210 = vadd.f32 %v194, %v208
    %211 = vst [vmem:[#allocation6] sm:$0x1] %v209
    %212 = vst [vmem:[#allocation6 + $0x1] sm:$0x1] %v210
    // Predicated region
    $region22: #{tpu_custom_call.1} parent=1 // pred_check
      %p213 = pneg %p40
    $region23: #{tpu_custom_call.1} parent=1 // pred_check_branch
      %215 = sbr.rel (%p213) target = $region25
    $region24: #{tpu_custom_call.1} parent=1 // pred_region
      %v216 = vld [vmem:[#allocation2] sm:$0x1]
      %v217 = vld [vmem:[#allocation2 + $0x1] sm:$0x1]
      %vm218 = vcmask 1040384
      %v219 = vsel %vm218, %v216, 0.0
      %220 = vadd.xlane.f32.xlu0 %v219
      %v221 = vpop.xlane.xlu0 %220
      %v222 = vsel %vm218, %v217, 0.0
      %223 = vadd.xlane.f32.xlu0 %v222
      %v224 = vpop.xlane.xlu0 %223
      %v225 = vadd.f32 %v221, 0.0
      %v226 = vadd.f32 %v224, 0.0
      %vm227 = vcmask 0
      %v228 = vsel %vm227, %v225, 0.0
      %v229 = vsel %vm227, %v226, 0.0
      %v230 = vadd.f32 %v228, %v229
      %231 = vadd.xlane.f32.xlu0 %v230
      %v232 = vpop.xlane.xlu0 %231
      %v233 = vrot.slane %v232, 4
      %v234 = vadd.f32 %v232, %v233
      %v235 = vrot.slane %v234, 2
      %v236 = vadd.f32 %v234, %v235
      %v237 = vrot.slane %v236, 1
      %v238 = vadd.f32 %v236, %v237
      %s239 = vtos %v238
      %v240 = vld [vmem:[#allocation3] sm:$0x1]
      %v241 = vld [vmem:[#allocation3 + $0x1] sm:$0x1]
      %v242 = vsel %vm218, %v240, 0.0
      %243 = vadd.xlane.f32.xlu0 %v242
      %v244 = vpop.xlane.xlu0 %243
      %v245 = vsel %vm218, %v241, 0.0
      %246 = vadd.xlane.f32.xlu0 %v245
      %v247 = vpop.xlane.xlu0 %246
      %v248 = vadd.f32 %v244, 0.0
      %v249 = vadd.f32 %v247, 0.0
      %v250 = vsel %vm227, %v248, 0.0
      %v251 = vsel %vm227, %v249, 0.0
      %v252 = vadd.f32 %v250, %v251
      %253 = vadd.xlane.f32.xlu0 %v252
      %v254 = vpop.xlane.xlu0 %253
      %v255 = vrot.slane %v254, 4
      %v256 = vadd.f32 %v254, %v255
      %v257 = vrot.slane %v256, 2
      %v258 = vadd.f32 %v256, %v257
      %v259 = vrot.slane %v258, 1
      %v260 = vadd.f32 %v258, %v259
      %s261 = vtos %v260
      %v262 = vld [vmem:[#allocation4] sm:$0x1]
      %v263 = vld [vmem:[#allocation4 + $0x1] sm:$0x1]
      %v264 = vsel %vm218, %v262, 0.0
      %265 = vadd.xlane.f32.xlu0 %v264
      %v266 = vpop.xlane.xlu0 %265
      %v267 = vsel %vm218, %v263, 0.0
      %268 = vadd.xlane.f32.xlu0 %v267
      %v269 = vpop.xlane.xlu0 %268
      %v270 = vadd.f32 %v266, 0.0
      %v271 = vadd.f32 %v269, 0.0
      %v272 = vld [vmem:[#allocation5] sm:$0x1]
      %v273 = vld [vmem:[#allocation5 + $0x1] sm:$0x1]
      %v274 = vsel %vm218, %v272, 0.0
      %275 = vadd.xlane.f32.xlu0 %v274
      %v276 = vpop.xlane.xlu0 %275
      %v277 = vsel %vm218, %v273, 0.0
      %278 = vadd.xlane.f32.xlu0 %v277
      %v279 = vpop.xlane.xlu0 %278
      %v280 = vadd.f32 %v276, 0.0
      %v281 = vadd.f32 %v279, 0.0
      %v282 = vld [vmem:[#allocation6] sm:$0x1]
      %v283 = vld [vmem:[#allocation6 + $0x1] sm:$0x1]
      %v284 = vsel %vm218, %v282, 0.0
      %285 = vadd.xlane.f32.xlu0 %v284
      %v286 = vpop.xlane.xlu0 %285
      %v287 = vsel %vm218, %v283, 0.0
      %288 = vadd.xlane.f32.xlu0 %v287
      %v289 = vpop.xlane.xlu0 %288
      %v290 = vadd.f32 %v286, 0.0
      %v291 = vadd.f32 %v289, 0.0
      %v292 = vmul.f32 %v270, 2.0
      %v293 = vmul.f32 %v271, 2.0
      %v294 = vadd.f32 %v292, 1.0
      %v295 = vadd.f32 %v293, 1.0
      %v296 = vadd.f32 %v280, %v290
      %v297 = vadd.f32 %v281, %v291
      %v298 = vadd.f32 %v296, 1.0
      %v299 = vadd.f32 %v297, 1.0
      %v300 = vrcp.pop %v298
      %v301 = vmul.f32 %v294, %v300
      %v302 = vrcp.pop %v299
      %v303 = vmul.f32 %v295, %v302
      %v304 = vsel %vm227, %v301, 0.0
      %v305 = vsel %vm227, %v303, 0.0
      %v306 = vadd.f32 %v304, %v305
      %307 = vadd.xlane.f32.xlu0 %v306
      %v308 = vpop.xlane.xlu0 %307
      %v309 = vrot.slane %v308, 4
      %v310 = vadd.f32 %v308, %v309
      %v311 = vrot.slane %v310, 2
      %v312 = vadd.f32 %v310, %v311
      %v313 = vrot.slane %v312, 1
      %v314 = vadd.f32 %v312, %v313
      %s315 = vtos %v314
      %s316 = smul.f32 %s315, 0.5
      %s317 = ssub.f32 1.0, %s316
      %s318 = smul.f32 %s239, 0.001953125
      %s319 = smul.f32 %s261, 0.0015625
      %s320 = smul.f32 %s318, 0.3
      %s321 = smul.f32 %s317, 0.5
      %s322 = sadd.f32 %s320, %s321
      %s323 = smul.f32 %s319, 0.2
      %s324 = sadd.f32 %s322, %s323
      %s325 = scalar_lea.smem [#allocation12], 0
      %326 = sst [smem:[%s325]] %s324
    $region25: #{tpu_custom_call.1} parent=1 // pred_fallthru
      _
    // Predicated region
    $region26: #{tpu_custom_call.1} parent=1 // pred_check
      _
    $region27: #{tpu_custom_call.1} parent=1 // pred_check_branch
      %328 = sbr.rel (0) target = $region29
    $region28: #{tpu_custom_call.1} parent=1 // pred_region
      %s330 = ssub.s32 16, 16
      %331 = vsyncadd [#allocation9], %s330
      %334 = dma.smem_to_hbm [#allocation12], 16, %s2, [#allocation9]
    $region29: #{tpu_custom_call.1} parent=1 // pred_fallthru
      _
    // Predicated region
    $region30: #{tpu_custom_call.1} parent=1 // pred_check
      _
    $region31: #{tpu_custom_call.1} parent=1 // pred_check_branch
      %336 = sbr.rel (0) target = $region33
    $region32: #{tpu_custom_call.1} parent=1 // pred_region
      %337 = dma.done [#allocation9], 16
    $region33: #{tpu_custom_call.1} parent=1 // pred_fallthru
      _
    %338 = sfence
    %339 = vsyncpa [#allocation8], 1
    %340 = vsyncpa [#allocation11], 1
    %341 = vsyncpa [#allocation9], 1

</llo_original>
